<compile_context>
chip_gen: v5e
topology: v5e:2x2
jax: 0.10.0
libtpu: 0.0.40
codegen_flags: <defaults>
</compile_context>

<pallas_src>
import functools

import jax
import jax.numpy as jnp
from jax.experimental import pallas as pl
from jax.experimental.pallas import tpu as pltpu


def _ls_kernel_noweight(pred_ref, target_ref, out_ref, *,
                        confidence, smooth_val, n_rows, block_rows):
    pred = pred_ref[...].astype(jnp.float32)            # (TN, C)
    tgt = target_ref[...]                                # (TN, 1) int32
    tn, c = pred.shape

    m = jnp.max(pred, axis=-1, keepdims=True)
    shifted = pred - m                                   # (TN, C)
    lse = jnp.log(jnp.sum(jnp.exp(shifted), axis=-1, keepdims=True))  # (TN, 1)

    # sum_c(logp) = sum_c(shifted) - C*lse ; logp[target] = shifted[target] - lse
    row_sum_logp = jnp.sum(shifted, axis=-1, keepdims=True) - jnp.float32(c) * lse
    col = jax.lax.broadcasted_iota(jnp.int32, (tn, c), 1)
    tgt_logp = (jnp.sum(jnp.where(col == tgt, shifted, 0.0),
                        axis=-1, keepdims=True) - lse)

    per_row = (-jnp.float32(smooth_val) * row_sum_logp
               - jnp.float32(confidence - smooth_val) * tgt_logp)      # (TN, 1)

    # Mask padded / remainder rows so they contribute exactly 0 to the mean.
    row_ids = (pl.program_id(0) * block_rows
               + jax.lax.broadcasted_iota(jnp.int32, (tn, 1), 0))
    per_row = jnp.where(row_ids < n_rows, per_row, 0.0)

    out_ref[0, 0] = jnp.sum(per_row)


def _ls_kernel_weight(pred_ref, target_ref, weight_ref, out_ref, *,
                      confidence, smooth_val, n_rows, block_rows):
    pred = pred_ref[...].astype(jnp.float32)             # (TN, C)
    tgt = target_ref[...]                                 # (TN, 1) int32
    w = weight_ref[...].astype(jnp.float32)               # (1, C)
    tn, c = pred.shape

    m = jnp.max(pred, axis=-1, keepdims=True)
    shifted = pred - m
    lse = jnp.log(jnp.sum(jnp.exp(shifted), axis=-1, keepdims=True))   # (TN, 1)

    logp_w = (shifted - lse) * w                                       # (TN, C)
    row_sum = jnp.sum(logp_w, axis=-1, keepdims=True)                  # (TN, 1)
    col = jax.lax.broadcasted_iota(jnp.int32, (tn, c), 1)
    tgt_val = jnp.sum(jnp.where(col == tgt, logp_w, 0.0),
                      axis=-1, keepdims=True)                          # (TN, 1)

    per_row = (-jnp.float32(smooth_val) * row_sum
               - jnp.float32(confidence - smooth_val) * tgt_val)       # (TN, 1)

    row_ids = (pl.program_id(0) * block_rows
               + jax.lax.broadcasted_iota(jnp.int32, (tn, 1), 0))
    per_row = jnp.where(row_ids < n_rows, per_row, 0.0)

    out_ref[0, 0] = jnp.sum(per_row)


def _choose_block_rows(n, c, itemsize):
    """Largest row tile that keeps the native-dtype pred tile ~4 MiB
    (double-buffered by Pallas), a multiple of 16 rows (bf16 packing),
    and not pointlessly larger than the (padded) batch."""
    budget_bytes = 4 * 1024 * 1024
    tn = budget_bytes // max(1, c * itemsize)
    tn = max(16, min(1024, (tn // 16) * 16))
    n_pad16 = ((n + 15) // 16) * 16
    return min(tn, max(16, n_pad16))


def label_smoothing_loss(pred, target, *, classes, smoothing=0.0, weight=None,
                         block_rows=None):
    """Pallas implementation of LabelSmoothingLoss.forward (dim=-1).

    pred:   (N, C) float logits (f32 or bf16)
    target: (N,)   int class indices
    weight: optional (C,) per-class multiplier
    returns scalar float32 loss
    """
    assert 0.0 <= smoothing < 1.0
    assert classes > 1, "smoothing/(classes-1) requires classes > 1"
    n, c = pred.shape
    assert c == classes

    # Fold the 1/N batch mean into the constants: the kernel only ever sums.
    confidence = (1.0 - smoothing) / n
    smooth_val = smoothing / (classes - 1) / n

    if block_rows is None:
        block_rows = _choose_block_rows(n, c, jnp.dtype(pred.dtype).itemsize)
    num_tiles = pl.cdiv(n, block_rows)
    n_pad = num_tiles * block_rows

    target2d = target.astype(jnp.int32).reshape(n, 1)
    if n_pad != n:
        pred = jnp.pad(pred, ((0, n_pad - n), (0, 0)))
        target2d = jnp.pad(target2d, ((0, n_pad - n), (0, 0)))

    pred_spec = pl.BlockSpec((block_rows, c), lambda i: (i, 0))
    tgt_spec = pl.BlockSpec((block_rows, 1), lambda i: (i, 0))
    out_spec = pl.BlockSpec((1, 1), lambda i: (i, 0), memory_space=pltpu.SMEM)

    common = dict(confidence=confidence, smooth_val=smooth_val,
                  n_rows=n, block_rows=block_rows)

    if weight is None:
        kernel = functools.partial(_ls_kernel_noweight, **common)
        in_specs = [pred_spec, tgt_spec]
        args = (pred, target2d)
    else:
        kernel = functools.partial(_ls_kernel_weight, **common)
        in_specs = [pred_spec, tgt_spec,
                    pl.BlockSpec((1, c), lambda i: (0, 0))]
        args = (pred, target2d, weight.astype(jnp.float32).reshape(1, c))

    partials = pl.pallas_call(
        kernel,
        out_shape=jax.ShapeDtypeStruct((num_tiles, 1), jnp.float32),
        grid=(num_tiles,),
        in_specs=in_specs,
        out_specs=out_spec,
        compiler_params=pltpu.CompilerParams(
            dimension_semantics=("parallel",)),
    )(*args)

    # Constants already carry 1/N, so the mean is just the sum of partials.
    return jnp.sum(partials)


def label_smoothing_loss_ref(pred, target, *, classes, smoothing=0.0, weight=None):
    """Pure-JAX reference mirroring the PyTorch forward."""
    logp = jax.nn.log_softmax(pred.astype(jnp.float32), axis=-1)
    if weight is not None:
        logp = logp * weight.astype(jnp.float32)[None, :]
    confidence = 1.0 - smoothing
    smooth_val = smoothing / (classes - 1)
    true_dist = jnp.full_like(logp, smooth_val)
    true_dist = true_dist.at[jnp.arange(pred.shape[0]), target].set(confidence)
    return jnp.mean(jnp.sum(-true_dist * logp, axis=-1))


if __name__ == "__main__":
    key = jax.random.PRNGKey(0)
    k_pred, k_tgt, k_w, k_pred2, k_tgt2 = jax.random.split(key, 5)

    smoothing = 0.1

    # --- Case 1: small shapes, f32, with and without per-class weight ------
    N, C = 8, 32
    pred = jax.random.normal(k_pred, (N, C), dtype=jnp.float32)
    target = jax.random.randint(k_tgt, (N,), 0, C, dtype=jnp.int32)
    weight = 0.5 + jax.random.uniform(k_w, (C,), dtype=jnp.float32)

    loss = jax.block_until_ready(
        label_smoothing_loss(pred, target, classes=C,
                             smoothing=smoothing, weight=weight))
    ref = label_smoothing_loss_ref(pred, target, classes=C,
                                   smoothing=smoothing, weight=weight)
    assert jnp.allclose(loss, ref, atol=1e-5, rtol=1e-5), (loss, ref)

    loss_nw = jax.block_until_ready(
        label_smoothing_loss(pred, target, classes=C, smoothing=smoothing))
    ref_nw = label_smoothing_loss_ref(pred, target, classes=C,
                                      smoothing=smoothing)
    assert jnp.allclose(loss_nw, ref_nw, atol=1e-5, rtol=1e-5), (loss_nw, ref_nw)

    # --- Case 2: multi-tile grid with remainder rows (masking path) --------
    N2, C2 = 20, 128
    pred2 = jax.random.normal(k_pred2, (N2, C2), dtype=jnp.float32)
    target2 = jax.random.randint(k_tgt2, (N2,), 0, C2, dtype=jnp.int32)
    loss2 = jax.block_until_ready(
        label_smoothing_loss(pred2, target2, classes=C2,
                             smoothing=smoothing, block_rows=16))
    ref2 = label_smoothing_loss_ref(pred2, target2, classes=C2,
                                    smoothing=smoothing)
    assert jnp.allclose(loss2, ref2, atol=1e-5, rtol=1e-5), (loss2, ref2)

    # --- Case 3: bf16 logits stay bf16 on the wire, cast per tile ----------
    pred_bf16 = pred.astype(jnp.bfloat16)
    loss_bf = jax.block_until_ready(
        label_smoothing_loss(pred_bf16, target, classes=C,
                             smoothing=smoothing, weight=weight))
    ref_bf = label_smoothing_loss_ref(pred_bf16.astype(jnp.float32), target,
                                      classes=C, smoothing=smoothing,
                                      weight=weight)
    assert jnp.allclose(loss_bf, ref_bf, atol=1e-5, rtol=1e-5), (loss_bf, ref_bf)

    print("KERNEL_OK")
</pallas_src>

<mosaic_0001>
module attributes {stable_mosaic.version = 11 : i64} {
  func.func @_ls_kernel_weight(%arg0: i32, %arg1: memref<16x32xf32, #tpu.memory_space<vmem>>, %arg2: memref<16x1xi32, #tpu.memory_space<vmem>>, %arg3: memref<1x32xf32, #tpu.memory_space<vmem>>, %arg4: memref<1x1xf32, #tpu.memory_space<smem>>) attributes {dimension_semantics = [#tpu.dimension_semantics<parallel>], iteration_bounds = array<i64: 1>, scalar_prefetch = 0 : i64, scratch_operands = 0 : i64, tpu.core_type = #tpu.core_type<tc>, window_params = [{transform_indices = @transform_0, window_bounds = array<i64: 16, 32>}, {transform_indices = @transform_1, window_bounds = array<i64: 16, 1>}, {pipeline_mode = #tpu.pipeline_mode<synchronous>, transform_indices = @transform_2, window_bounds = array<i64: 1, 32>}, {transform_indices = @transform_3, window_bounds = array<i64: 1, 1>}]} {
    %c0 = arith.constant 0 : index
    %c0_0 = arith.constant 0 : index
    %0 = vector.load %arg1[%c0, %c0_0] : memref<16x32xf32, #tpu.memory_space<vmem>>, vector<16x32xf32>
    %c0_1 = arith.constant 0 : index
    %c0_2 = arith.constant 0 : index
    %1 = vector.load %arg2[%c0_1, %c0_2] : memref<16x1xi32, #tpu.memory_space<vmem>>, vector<16x1xi32>
    %c0_3 = arith.constant 0 : index
    %c0_4 = arith.constant 0 : index
    %2 = vector.load %arg3[%c0_3, %c0_4] : memref<1x32xf32, #tpu.memory_space<vmem>>, vector<1x32xf32>
    %cst = arith.constant dense<0xFF800000> : vector<16xf32>
    %3 = vector.multi_reduction <maximumf>, %0, %cst [1] : vector<16x32xf32> to vector<16xf32>
    %4 = vector.shape_cast %3 : vector<16xf32> to vector<16x1xf32>
    %5 = vector.broadcast %4 : vector<16x1xf32> to vector<16x32xf32>
    %6 = arith.subf %0, %5 : vector<16x32xf32>
    %7 = math.exp %6 : vector<16x32xf32>
    %cst_5 = arith.constant dense<0.000000e+00> : vector<16xf32>
    %8 = vector.multi_reduction <add>, %7, %cst_5 [1] : vector<16x32xf32> to vector<16xf32>
    %9 = vector.shape_cast %8 : vector<16xf32> to vector<16x1xf32>
    %10 = math.log %9 : vector<16x1xf32>
    %11 = vector.broadcast %10 : vector<16x1xf32> to vector<16x32xf32>
    %12 = arith.subf %6, %11 : vector<16x32xf32>
    %13 = vector.broadcast %2 : vector<1x32xf32> to vector<16x32xf32>
    %14 = arith.mulf %12, %13 : vector<16x32xf32>
    %cst_6 = arith.constant dense<0.000000e+00> : vector<16xf32>
    %15 = vector.multi_reduction <add>, %14, %cst_6 [1] : vector<16x32xf32> to vector<16xf32>
    %16 = vector.shape_cast %15 : vector<16xf32> to vector<16x1xf32>
    %17 = tpu.iota {dimensions = array<i32: 1>} : vector<16x32xi32>
    %18 = vector.broadcast %1 : vector<16x1xi32> to vector<16x32xi32>
    %19 = arith.cmpi eq, %17, %18 : vector<16x32xi32>
    %cst_7 = arith.constant 0.000000e+00 : f32
    %20 = vector.broadcast %cst_7 : f32 to vector<16x32xf32>
    %21 = arith.select %19, %14, %20 : vector<16x32xi1>, vector<16x32xf32>
    %cst_8 = arith.constant dense<0.000000e+00> : vector<16xf32>
    %22 = vector.multi_reduction <add>, %21, %cst_8 [1] : vector<16x32xf32> to vector<16xf32>
    %23 = vector.shape_cast %22 : vector<16xf32> to vector<16x1xf32>
    %cst_9 = arith.constant 0.000000e+00 : f32
    %cst_10 = arith.constant 4.032258E-4 : f32
    %24 = arith.subf %cst_9, %cst_10 : f32
    %25 = vector.broadcast %24 : f32 to vector<16x1xf32>
    %26 = arith.mulf %25, %16 : vector<16x1xf32>
    %cst_11 = arith.constant 0.112096772 : f32
    %27 = vector.broadcast %cst_11 : f32 to vector<16x1xf32>
    %28 = arith.mulf %27, %23 : vector<16x1xf32>
    %29 = arith.subf %26, %28 : vector<16x1xf32>
    %c16_i32 = arith.constant 16 : i32
    %30 = arith.muli %arg0, %c16_i32 : i32
    %31 = tpu.iota {dimensions = array<i32: 0>} : vector<16x1xi32>
    %32 = vector.broadcast %30 : i32 to vector<16x1xi32>
    %33 = arith.addi %32, %31 : vector<16x1xi32>
    %c8_i32 = arith.constant 8 : i32
    %34 = vector.broadcast %c8_i32 : i32 to vector<16x1xi32>
    %35 = arith.cmpi slt, %33, %34 : vector<16x1xi32>
    %cst_12 = arith.constant 0.000000e+00 : f32
    %36 = vector.broadcast %cst_12 : f32 to vector<16x1xf32>
    %37 = arith.select %35, %29, %36 : vector<16x1xi1>, vector<16x1xf32>
    %38 = vector.shape_cast %37 : vector<16x1xf32> to vector<1x16x1xf32>
    %cst_13 = arith.constant dense<0.000000e+00> : vector<1xf32>
    %39 = vector.multi_reduction <add>, %38, %cst_13 [1, 2] : vector<1x16x1xf32> to vector<1xf32>
    %40 = vector.shape_cast %39 : vector<1xf32> to vector<1x1x1xf32>
    %41 = vector.extract %40[0, 0, 0] : f32 from vector<1x1x1xf32>
    %c0_14 = arith.constant 0 : index
    %c0_15 = arith.constant 0 : index
    %42 = memref.load %arg4[%c0_14, %c0_15] : memref<1x1xf32, #tpu.memory_space<smem>>
    memref.store %41, %arg4[%c0_14, %c0_15] : memref<1x1xf32, #tpu.memory_space<smem>>
    return
  }
  func.func @transform_0(%arg0: i32) -> (i32, i32) {
    %c0_i32 = arith.constant 0 : i32
    %c0_i32_0 = arith.constant 0 : i32
    return %arg0, %c0_i32 : i32, i32
  }
  func.func @transform_1(%arg0: i32) -> (i32, i32) {
    %c0_i32 = arith.constant 0 : i32
    %c0_i32_0 = arith.constant 0 : i32
    return %arg0, %c0_i32 : i32, i32
  }
  func.func @transform_2(%arg0: i32) -> (i32, i32) {
    %c0_i32 = arith.constant 0 : i32
    %c0_i32_0 = arith.constant 0 : i32
    %c0_i32_1 = arith.constant 0 : i32
    return %c0_i32, %c0_i32_0 : i32, i32
  }
  func.func @transform_3(%arg0: i32) -> (i32, i32) {
    %c0_i32 = arith.constant 0 : i32
    %c0_i32_0 = arith.constant 0 : i32
    return %arg0, %c0_i32 : i32, i32
  }
}

</mosaic_0001>

<llo_original>
// kernel: tpu_custom_call.1
$region0: #{tpu_custom_call.1}
  #allocation0 [shape = 'u32[]', space=smem, size = 0x4, offset = 0x4, fixed_abs, tag = 'smem constant byte address 0x4 - core index']
  #allocation1 [shape = 'u32[72,128]{1,0:T(1,128)}', space=vmem, size = 0x9000, scoped, tag = 'internal scratch']
  %s0 = inlined_call_operand.vmem [shape: f32[16,32], index: 0, kind: input, shape index: {}]
  %s1 = inlined_call_operand.vmem [shape: s32[16,1], index: 1, kind: input, shape index: {}]
  %s2 = inlined_call_operand.vmem [shape: f32[1,32], index: 2, kind: input, shape index: {}]
  %s3 = inlined_call_operand.hbm [shape: f32[1,1], index: 3, kind: output, shape index: {}]
  %s4 = sld [smem:[#allocation0]]
  $region22: #{tpu_custom_call.1} parent=0
    _
  %s6 = ssub.s32 1, %s4
  %s7 = scalar_select 0, %s6, %s4
  $region1: #{tpu_custom_call.1} parent=0
    #allocation2 [shape = 'u8[512]{0}', space=smem, size = 0x200, scoped, tag = 'output window, operand 0, single buffered']
    #allocation3 [shape = 's32[1]{0}', space=sflag, size = 0x4, scoped, tag = 'scoped memory for tpu_custom_call.1']
    %8 = vsyncpa [#allocation3], 0
    // Predicated region
    $region2: #{tpu_custom_call.1} parent=1 // pred_check
      _
    $region3: #{tpu_custom_call.1} parent=1 // pred_check_branch
      %10 = sbr.rel (0) target = $region5
    $region4: #{tpu_custom_call.1} parent=1 // pred_region
      _
    $region5: #{tpu_custom_call.1} parent=1 // pred_fallthru
      _
    // Predicated region
    $region6: #{tpu_custom_call.1} parent=1 // pred_check
      _
    $region7: #{tpu_custom_call.1} parent=1 // pred_check_branch
      %12 = sbr.rel (0) target = $region9
    $region8: #{tpu_custom_call.1} parent=1 // pred_region
      _
    $region9: #{tpu_custom_call.1} parent=1 // pred_fallthru
      _
    // Predicated region
    $region10: #{tpu_custom_call.1} parent=1 // pred_check
      _
    $region11: #{tpu_custom_call.1} parent=1 // pred_check_branch
      %14 = sbr.rel (0) target = $region13
    $region12: #{tpu_custom_call.1} parent=1 // pred_region
      _
    $region13: #{tpu_custom_call.1} parent=1 // pred_fallthru
      _
    %v15 = vld [vmem:[%s0] sm:$0xff]
    %v16 = vld [vmem:[%s0 + $0x8] sm:$0xff]
    %v17 = vld [vmem:[%s1] sm:$0xff]
    %v18 = vld [vmem:[%s1 + $0x8] sm:$0xff]
    %v19 = vld [vmem:[%s2] sm:$0x1]
    %vm20 = vcmask 261120
    %v21 = vsel %vm20, %v15, -inf
    %22 = vmax.xlane.f32.xlu0 %v21
    %v23 = vpop.xlane.xlu0 %22
    %v24 = vsel %vm20, %v16, -inf
    %25 = vmax.xlane.f32.xlu0 %v24
    %v26 = vpop.xlane.xlu0 %25
    %v27 = vsub.f32 %v15, %v23
    %v28 = vsub.f32 %v16, %v26
    %v29 = vmul.f32 %v27, 1.442695
    %v30 = vpow.pop %v29
    %v31 = vmul.f32 %v28, 1.442695
    %v32 = vpow.pop %v31
    %v33 = vsel %vm20, %v30, 0.0
    %34 = vadd.xlane.f32.xlu0 %v33
    %v35 = vpop.xlane.xlu0 %34
    %v36 = vsel %vm20, %v32, 0.0
    %37 = vadd.xlane.f32.xlu0 %v36
    %v38 = vpop.xlane.xlu0 %37
    %v39 = vlog2.pop %v35
    %v40 = vmul.f32 %v39, 0.6931472
    %v41 = vlog2.pop %v38
    %v42 = vmul.f32 %v41, 0.6931472
    %v43 = vsub.f32 %v27, %v40
    %v44 = vsub.f32 %v28, %v42
    %v46 = vperm.slane %v19, 0
    %v48 = vmul.f32 %v43, %v46
    %v49 = vmul.f32 %v44, %v46
    %v50 = vsel %vm20, %v48, 0.0
    %51 = vadd.xlane.f32.xlu0 %v50
    %v52 = vpop.xlane.xlu0 %51
    %v53 = vsel %vm20, %v49, 0.0
    %54 = vadd.xlane.f32.xlu0 %v53
    %v55 = vpop.xlane.xlu0 %54
    %v56 = vlaneseq
    %v57 = vand.u32 %v56, 127
    %58 = vset.pattern.permute.xlu0 0
    %59 = vperm.xlu0 %58, %v17
    %v60 = vpop.permute.xlu0 %59
    %61 = vset.pattern.permute.xlu0 0
    %62 = vperm.xlu0 %61, %v18
    %v63 = vpop.permute.xlu0 %62
    %vm64 = vcmp.eq.s32.totalorder %v57, %v60
    %vm65 = vcmp.eq.s32.totalorder %v57, %v63
    %v66 = vsel %vm64, %v48, 0.0
    %v67 = vsel %vm65, %v49, 0.0
    %v68 = vsel %vm20, %v66, 0.0
    %69 = vadd.xlane.f32.xlu0 %v68
    %v70 = vpop.xlane.xlu0 %69
    %v71 = vsel %vm20, %v67, 0.0
    %72 = vadd.xlane.f32.xlu0 %v71
    %v73 = vpop.xlane.xlu0 %72
    %v74 = vmul.f32 %v52, -0.0004032258
    %v75 = vmul.f32 %v55, -0.0004032258
    %v76 = vmul.f32 %v70, 0.11209677
    %v77 = vmul.f32 %v73, 0.11209677
    %v78 = vsub.f32 %v74, %v76
    %v79 = vsub.f32 %v75, %v77
    %s80 = smul.u32 0, 16
    %v81 = vlaneseq
    %v82 = vshrl.u32 %v81, 7
    %v83 = vadd.s32 %v82, 8
    %v84 = vstv %s80
    %v85 = vadd.s32 %v84, %v82
    %v86 = vadd.s32 %v84, %v83
    %vm87 = vcmp.lt.s32.totalorder %v85, 8
    %vm88 = vcmp.lt.s32.totalorder %v86, 8
    %v89 = vsel %vm87, %v78, 0.0
    %v90 = vsel %vm88, %v79, 0.0
    %vm91 = vcmask 7168
    %v92 = vsel %vm91, %v89, 0.0
    %v93 = vsel %vm91, %v90, 0.0
    %v94 = vadd.f32 %v92, %v93
    %95 = vadd.xlane.f32.xlu0 %v94
    %v96 = vpop.xlane.xlu0 %95
    %v97 = vrot.slane %v96, 4
    %v98 = vadd.f32 %v96, %v97
    %v99 = vrot.slane %v98, 2
    %v100 = vadd.f32 %v98, %v99
    %v101 = vrot.slane %v100, 1
    %v102 = vadd.f32 %v100, %v101
    %s103 = vtos %v102
    %s104 = scalar_lea.smem [#allocation2], 0
    %105 = sst [smem:[%s104]] %s103
    // Predicated region
    $region14: #{tpu_custom_call.1} parent=1 // pred_check
      _
    $region15: #{tpu_custom_call.1} parent=1 // pred_check_branch
      %107 = sbr.rel (0) target = $region17
    $region16: #{tpu_custom_call.1} parent=1 // pred_region
      %109 = vsyncadd [#allocation3], 0
      %s111 = sshll.u32 %s3, 4
      %s112 = int_to_ptr.hbm [resolvable:$true] %s111
      %114 = dma.smem_to_hbm [#allocation2], 16, %s112, [#allocation3]
    $region17: #{tpu_custom_call.1} parent=1 // pred_fallthru
      _
    // Predicated region
    $region18: #{tpu_custom_call.1} parent=1 // pred_check
      _
    $region19: #{tpu_custom_call.1} parent=1 // pred_check_branch
      %116 = sbr.rel (0) target = $region21
    $region20: #{tpu_custom_call.1} parent=1 // pred_region
      %118 = dma.done [#allocation3], 16
    $region21: #{tpu_custom_call.1} parent=1 // pred_fallthru
      _
    %119 = sfence
    %120 = vsyncpa [#allocation3], 1

</llo_original>
